<compile_context>
chip_gen: v6e
topology: v6e:2x2x1
jax: 0.10.0
libtpu: 0.0.40
codegen_flags: <defaults>
</compile_context>

<pallas_src>
import jax
import jax.numpy as jnp
from jax.experimental import pallas as pl
from jax.experimental.pallas import tpu as pltpu

LANE = 128      # lane-dense feature padding -> unmasked full-lane vector loads/stores
SUBLANE = 8     # batch (sublane) granularity


def _round_up(x, m):
    return (x + m - 1) // m * m


def _vmem_capacity_bytes():
    # Physical per-core VMEM (v5e/v6e: 128 MiB, v7x: 64 MiB). Conservative fallback.
    try:
        return int(pltpu.get_tpu_info().vmem_capacity_bytes)
    except Exception:
        return 64 << 20


def mlp_kernel(h_ref, w1_ref, b1_ref, w2_ref, b2_ref, o_ref):
    # Two bf16 MXU matmuls with f32 accumulation; bias add + ReLU on the VPU.
    z1 = jnp.dot(h_ref[...], w1_ref[...], preferred_element_type=jnp.float32)
    a1 = jnp.maximum(z1 + b1_ref[...], 0.0)                 # act = F.relu
    z2 = jnp.dot(a1.astype(w2_ref.dtype), w2_ref[...],
                 preferred_element_type=jnp.float32)
    o_ref[...] = (z2 + b2_ref[...]).astype(o_ref.dtype)


def prepare_mlp_params(w1, b1, w2, b2, *, compute_dtype=jnp.bfloat16):
    """One-time weight prep (hoisted out of the forward path).

    Transposes PyTorch-layout weights to (in, out), zero-pads features to
    multiples of 128 (numerically exact: padded rows/cols contribute nothing and
    padded outputs are sliced off) and casts weights to the MXU compute dtype.
    Biases stay f32 (added after f32 accumulation).
    """
    H, D_in = w1.shape
    D_out = w2.shape[0]
    D_in_p, H_p, D_out_p = (_round_up(d, LANE) for d in (D_in, H, D_out))

    w1_t = jnp.zeros((D_in_p, H_p), compute_dtype).at[:D_in, :H].set(
        w1.T.astype(compute_dtype))
    w2_t = jnp.zeros((H_p, D_out_p), compute_dtype).at[:H, :D_out].set(
        w2.T.astype(compute_dtype))
    b1_p = jnp.zeros((1, H_p), jnp.float32).at[0, :H].set(b1.astype(jnp.float32))
    b2_p = jnp.zeros((1, D_out_p), jnp.float32).at[0, :D_out].set(b2.astype(jnp.float32))
    return (w1_t, b1_p, w2_t, b2_p), D_out


def _mlp_forward_padded(h, w1_t, b1_p, w2_t, b2_p, d_out, max_tile_m):
    B, D_in = h.shape
    D_in_p, H_p = w1_t.shape
    D_out_p = w2_t.shape[1]
    compute_dtype = w1_t.dtype
    out_dtype = h.dtype
    cdsize = jnp.dtype(compute_dtype).itemsize
    odsize = jnp.dtype(out_dtype).itemsize

    # --- VMEM accounting with the actual buffer counts -> batch-tile size. ---
    N_BUF_H = 3                                              # activation prefetch depth
    N_BUF_O = 2                                              # default output double-buffer
    weight_bytes = ((D_in_p * H_p + H_p * D_out_p) * cdsize  # bf16 weights, Buffered(1)
                    + (H_p + D_out_p) * 4)                   # f32 biases,   Buffered(1)
    per_row_bytes = (N_BUF_H * D_in_p * cdsize               # streamed h tiles
                     + N_BUF_O * D_out_p * odsize            # output tiles
                     + (H_p + D_out_p) * 4                   # f32 z1 / z2
                     + H_p * cdsize)                         # bf16 a1
    vmem_cap = _vmem_capacity_bytes()
    budget = int(0.80 * vmem_cap)
    rows = (budget - weight_bytes - (2 << 20)) // per_row_bytes
    tile_cap = max(SUBLANE, min(max_tile_m, (rows // SUBLANE) * SUBLANE))

    if B <= SUBLANE:
        tile_m = SUBLANE                      # single step; batch fits one sublane tile
    else:
        # >= 2 grid steps so ("parallel",) can shard across v7x's two TensorCores.
        tile_m = min(tile_cap, _round_up(pl.cdiv(B, 2), SUBLANE))
    B_p = _round_up(B, tile_m)
    grid_steps = B_p // tile_m
    n_buf_h = 2 if grid_steps <= 2 else N_BUF_H

    # --- Activation pad/cast, skipped when already aligned. ---
    if B_p == B and D_in_p == D_in and h.dtype == compute_dtype:
        h_p = h
    else:
        h_p = jnp.zeros((B_p, D_in_p), compute_dtype).at[:B, :D_in].set(
            h.astype(compute_dtype))

    # --- VMEM limit: what we actually need, capped to physical capacity. ---
    need = weight_bytes + tile_m * per_row_bytes + (4 << 20)
    vmem_limit = int(min(max(need, 16 << 20), int(0.9 * vmem_cap)))

    flops = 2 * B_p * (D_in_p * H_p + H_p * D_out_p)
    bytes_accessed = B_p * D_in_p * cdsize + B_p * D_out_p * odsize + weight_bytes
    cost = pl.CostEstimate(flops=flops, transcendentals=0, bytes_accessed=bytes_accessed)

    resident = pl.Buffered(1)   # constant index_map -> single VMEM buffer, no re-fetch

    out_p = pl.pallas_call(
        mlp_kernel,
        out_shape=jax.ShapeDtypeStruct((B_p, D_out_p), out_dtype),
        grid_spec=pltpu.PrefetchScalarGridSpec(
            num_scalar_prefetch=0,
            grid=(grid_steps,),
            in_specs=[
                pl.BlockSpec((tile_m, D_in_p), lambda i: (i, 0),
                             pipeline_mode=pl.Buffered(n_buf_h)),   # streamed activations
                pl.BlockSpec((D_in_p, H_p), lambda i: (0, 0), pipeline_mode=resident),
                pl.BlockSpec((1, H_p), lambda i: (0, 0), pipeline_mode=resident),
                pl.BlockSpec((H_p, D_out_p), lambda i: (0, 0), pipeline_mode=resident),
                pl.BlockSpec((1, D_out_p), lambda i: (0, 0), pipeline_mode=resident),
            ],
            out_specs=pl.BlockSpec((tile_m, D_out_p), lambda i: (i, 0)),
        ),
        compiler_params=pltpu.CompilerParams(
            dimension_semantics=("parallel",),   # batch steps shard across TCs on v7x
            vmem_limit_bytes=vmem_limit,
        ),
        cost_estimate=cost,
    )(h_p, w1_t, b1_p, w2_t, b2_p)

    if B_p == B and D_out_p == d_out:
        return out_p
    return out_p[:B, :d_out]


def make_mlp(w1, b1, w2, b2, *, compute_dtype=jnp.bfloat16, max_tile_m=1024):
    """Build a jitted fused-MLP forward with the weight prep hoisted and cached."""
    (w1_t, b1_p, w2_t, b2_p), d_out = prepare_mlp_params(
        w1, b1, w2, b2, compute_dtype=compute_dtype)

    @jax.jit
    def forward(h):
        return _mlp_forward_padded(h, w1_t, b1_p, w2_t, b2_p, d_out, max_tile_m)

    return forward


def mlp_forward(h, w1, b1, w2, b2, *, compute_dtype=jnp.bfloat16, max_tile_m=1024):
    """One-shot convenience wrapper (prefer make_mlp so the weight prep is cached)."""
    params, d_out = prepare_mlp_params(w1, b1, w2, b2, compute_dtype=compute_dtype)
    return _mlp_forward_padded(h, *params, d_out, max_tile_m)


def init_mlp_params(key, input_dim, hidden_dim, output_dim, dtype=jnp.float32):
    """Deterministic PyTorch-style (uniform +-1/sqrt(fan_in)) init for nn.Linear."""
    k1, k2, k3, k4 = jax.random.split(key, 4)
    bound1 = 1.0 / (input_dim ** 0.5)
    bound2 = 1.0 / (hidden_dim ** 0.5)
    # PyTorch stores weight as (out, in); keep that convention, transpose in prep.
    w1 = jax.random.uniform(k1, (hidden_dim, input_dim), dtype, -bound1, bound1)
    b1 = jax.random.uniform(k2, (hidden_dim,), dtype, -bound1, bound1)
    w2 = jax.random.uniform(k3, (output_dim, hidden_dim), dtype, -bound2, bound2)
    b2 = jax.random.uniform(k4, (output_dim,), dtype, -bound2, bound2)
    return w1, b1, w2, b2


if __name__ == "__main__":
    input_dim, hidden_dim, output_dim = 32, 64, 32
    batch = 16

    key = jax.random.PRNGKey(0)
    kx, kp = jax.random.split(key)
    h = jax.random.normal(kx, (batch, input_dim), jnp.float32)
    w1, b1, w2, b2 = init_mlp_params(kp, input_dim, hidden_dim, output_dim)

    mlp = make_mlp(w1, b1, w2, b2)           # weight pad/transpose/cast hoisted here
    out = jax.block_until_ready(mlp(h))

    # Reference mirroring the kernel's bf16-on-MXU / f32-accumulate numerics.
    cd = jnp.bfloat16
    z1 = jnp.dot(h.astype(cd), w1.T.astype(cd), preferred_element_type=jnp.float32) + b1
    a1 = jnp.maximum(z1, 0.0)
    ref_bf16 = jnp.dot(a1.astype(cd), w2.T.astype(cd),
                       preferred_element_type=jnp.float32) + b2
    # Exact f32 reference (same math as PyTorch MLP.forward).
    ref_f32 = jnp.maximum(h @ w1.T + b1, 0.0) @ w2.T + b2

    assert out.shape == (batch, output_dim)
    assert out.dtype == h.dtype
    assert jnp.allclose(out, ref_bf16, atol=2e-3, rtol=2e-3), "mismatch vs bf16 reference"
    assert jnp.allclose(out, ref_f32, atol=1e-1, rtol=5e-2), "mismatch vs f32 reference"

    print("KERNEL_OK")
</pallas_src>

<mosaic_0001>
module attributes {stable_mosaic.version = 11 : i64} {
  func.func @mlp_kernel(%arg0: i32, %arg1: memref<8x128xbf16, #tpu.memory_space<vmem>>, %arg2: memref<128x128xbf16, #tpu.memory_space<vmem>>, %arg3: memref<1x128xf32, #tpu.memory_space<vmem>>, %arg4: memref<128x128xbf16, #tpu.memory_space<vmem>>, %arg5: memref<1x128xf32, #tpu.memory_space<vmem>>, %arg6: memref<8x128xf32, #tpu.memory_space<vmem>>) attributes {dimension_semantics = [#tpu.dimension_semantics<parallel>], iteration_bounds = array<i64: 2>, scalar_prefetch = 0 : i64, scratch_operands = 0 : i64, tpu.core_type = #tpu.core_type<tc>, window_params = [{pipeline_mode = #tpu.pipeline_mode<double_buffered>, transform_indices = @transform_0, window_bounds = array<i64: 8, 128>}, {pipeline_mode = #tpu.pipeline_mode<synchronous>, transform_indices = @transform_1, window_bounds = array<i64: 128, 128>}, {pipeline_mode = #tpu.pipeline_mode<synchronous>, transform_indices = @transform_2, window_bounds = array<i64: 1, 128>}, {pipeline_mode = #tpu.pipeline_mode<synchronous>, transform_indices = @transform_3, window_bounds = array<i64: 128, 128>}, {pipeline_mode = #tpu.pipeline_mode<synchronous>, transform_indices = @transform_4, window_bounds = array<i64: 1, 128>}, {transform_indices = @transform_5, window_bounds = array<i64: 8, 128>}]} {
    %c0 = arith.constant 0 : index
    %c0_0 = arith.constant 0 : index
    %0 = vector.load %arg1[%c0, %c0_0] : memref<8x128xbf16, #tpu.memory_space<vmem>>, vector<8x128xbf16>
    %c0_1 = arith.constant 0 : index
    %c0_2 = arith.constant 0 : index
    %1 = vector.load %arg2[%c0_1, %c0_2] : memref<128x128xbf16, #tpu.memory_space<vmem>>, vector<128x128xbf16>
    %cst = arith.constant dense<0.000000e+00> : vector<8x128xf32>
    %2 = tpu.matmul %0, %1, %cst {dimension_numbers = #tpu.dot_dimension_numbers<[1], [0], [0], [1], [0, 0, 1, 1], [], []>} : vector<8x128xbf16>, vector<128x128xbf16>, vector<8x128xf32> -> vector<8x128xf32>
    %c0_3 = arith.constant 0 : index
    %c0_4 = arith.constant 0 : index
    %3 = vector.load %arg3[%c0_3, %c0_4] : memref<1x128xf32, #tpu.memory_space<vmem>>, vector<1x128xf32>
    %4 = vector.broadcast %3 : vector<1x128xf32> to vector<8x128xf32>
    %5 = arith.addf %2, %4 : vector<8x128xf32>
    %cst_5 = arith.constant 0.000000e+00 : f32
    %6 = vector.broadcast %cst_5 : f32 to vector<8x128xf32>
    %7 = arith.maximumf %5, %6 : vector<8x128xf32>
    %8 = arith.truncf %7 : vector<8x128xf32> to vector<8x128xbf16>
    %c0_6 = arith.constant 0 : index
    %c0_7 = arith.constant 0 : index
    %9 = vector.load %arg4[%c0_6, %c0_7] : memref<128x128xbf16, #tpu.memory_space<vmem>>, vector<128x128xbf16>
    %cst_8 = arith.constant dense<0.000000e+00> : vector<8x128xf32>
    %10 = tpu.matmul %8, %9, %cst_8 {dimension_numbers = #tpu.dot_dimension_numbers<[1], [0], [0], [1], [0, 0, 1, 1], [], []>} : vector<8x128xbf16>, vector<128x128xbf16>, vector<8x128xf32> -> vector<8x128xf32>
    %c0_9 = arith.constant 0 : index
    %c0_10 = arith.constant 0 : index
    %11 = vector.load %arg5[%c0_9, %c0_10] : memref<1x128xf32, #tpu.memory_space<vmem>>, vector<1x128xf32>
    %12 = vector.broadcast %11 : vector<1x128xf32> to vector<8x128xf32>
    %13 = arith.addf %10, %12 : vector<8x128xf32>
    %c0_11 = arith.constant 0 : index
    %c0_12 = arith.constant 0 : index
    %14 = vector.load %arg6[%c0_11, %c0_12] : memref<8x128xf32, #tpu.memory_space<vmem>>, vector<8x128xf32>
    tpu.vector_store %arg6[%c0_11, %c0_12], %13 {strides = array<i32>} : memref<8x128xf32, #tpu.memory_space<vmem>>, vector<8x128xf32>,
    return
  }
  func.func @transform_0(%arg0: i32) -> (i32, i32) {
    %c0_i32 = arith.constant 0 : i32
    %c0_i32_0 = arith.constant 0 : i32
    return %arg0, %c0_i32 : i32, i32
  }
  func.func @transform_1(%arg0: i32) -> (i32, i32) {
    %c0_i32 = arith.constant 0 : i32
    %c0_i32_0 = arith.constant 0 : i32
    %c0_i32_1 = arith.constant 0 : i32
    return %c0_i32, %c0_i32_0 : i32, i32
  }
  func.func @transform_2(%arg0: i32) -> (i32, i32) {
    %c0_i32 = arith.constant 0 : i32
    %c0_i32_0 = arith.constant 0 : i32
    %c0_i32_1 = arith.constant 0 : i32
    return %c0_i32, %c0_i32_0 : i32, i32
  }
  func.func @transform_3(%arg0: i32) -> (i32, i32) {
    %c0_i32 = arith.constant 0 : i32
    %c0_i32_0 = arith.constant 0 : i32
    %c0_i32_1 = arith.constant 0 : i32
    return %c0_i32, %c0_i32_0 : i32, i32
  }
  func.func @transform_4(%arg0: i32) -> (i32, i32) {
    %c0_i32 = arith.constant 0 : i32
    %c0_i32_0 = arith.constant 0 : i32
    %c0_i32_1 = arith.constant 0 : i32
    return %c0_i32, %c0_i32_0 : i32, i32
  }
  func.func @transform_5(%arg0: i32) -> (i32, i32) {
    %c0_i32 = arith.constant 0 : i32
    %c0_i32_0 = arith.constant 0 : i32
    return %arg0, %c0_i32 : i32, i32
  }
}

</mosaic_0001>

<llo_original>
// kernel: forward.1
$region0: #{forward.1}
  #allocation0 [shape = 'u32[]', space=smem, size = 0x4, offset = 0x4, fixed_abs, tag = 'smem constant byte address 0x4 - core index']
  #allocation1 [shape = 'u32[144,128]{1,0:T(1,128)}', space=vmem, size = 0x12000, scoped, tag = 'internal scratch']
  %s0 = inlined_call_operand.vmem [shape: bf16[16,128], index: 0, kind: input, shape index: {}]
  %s1 = inlined_call_operand.hbm [shape: bf16[128,128], index: 1, kind: input, shape index: {}]
  %s2 = inlined_call_operand.vmem [shape: f32[1,128], index: 2, kind: input, shape index: {}]
  %s3 = inlined_call_operand.hbm [shape: bf16[128,128], index: 3, kind: input, shape index: {}]
  %s4 = inlined_call_operand.vmem [shape: f32[1,128], index: 4, kind: input, shape index: {}]
  %s5 = inlined_call_operand.hbm [shape: f32[16,128], index: 5, kind: output, shape index: {}]
  %s6 = sld [smem:[#allocation0]]
  $region61: #{forward.1} parent=0
    _
  %s8 = ssub.s32 1, %s6
  %s9 = scalar_select 0, %s8, %s6
  $region1: #{forward.1} parent=0
    #allocation2 [shape = 'u8[32768]{0}', space=vmem, size = 0x8000, scoped, tag = 'input window, operand 1, single buffered']
    #allocation3 [shape = 's32[2]{0}', space=sflag, size = 0x8, scoped, tag = 'scoped memory for forward.1']
    #allocation4 [shape = 's32[2]{0}', space=sflag, size = 0x8, scoped, tag = 'scoped memory for forward.1']
    #allocation5 [shape = 'u8[32768]{0}', space=vmem, size = 0x8000, scoped, tag = 'input window, operand 3, single buffered']
    #allocation6 [shape = 's32[1]{0}', space=sflag, size = 0x4, scoped, tag = 'scoped memory for forward.1']
    #allocation7 [shape = 'u8[8192]{0}', space=vmem, size = 0x2000, scoped, tag = 'output window, operand 0']
    %10 = vsyncpa [#allocation3], 0
    %11 = vsyncpa [#allocation6], 0
    %12 = vsyncpa [#allocation4], 0
    %s13 = scalar_lea.sflag [#allocation4], 1
    %14 = vsyncpa %s13, 0
    loop: start=0, step=1, limit=4
    $region2: #{forward.1} parent=1 // loop_pre_header
      _
    $region3: #{forward.1} parent=1 // loop_header
      %s16 = sphi 0, %s20
      %p17 = scmp.ge.s32.totalorder %s16, 4
      %s26 = sphi 0, %s28
      %s29 = sphi 0, %s26
      %s30 = sphi 0, %s29
      %s46 = sphi 0, %s30
      %s50 = sphi 0, %s50
      %s52 = sphi 0, %s50
      %s53 = sphi 0, %s52
      %s67 = sphi 0, %s53
      %s71 = sphi 0, %s71
      %s73 = sphi 0, %s71
      %s74 = sphi 0, %s73
      %s88 = sphi 0, %s74
      %s92 = sphi 0, %s92
      %s94 = sphi 0, %s92
      %s95 = sphi 0, %s94
      %s109 = sphi 0, %s95
      %s113 = sphi 0, %s113
      %s115 = sphi 0, %s113
      %s116 = sphi 0, %s115
      %s130 = sphi 0, %s116
      %s136 = sphi 0, %s138
      %s139 = sphi 0, %s136
      %s140 = sphi 0, %s139
      %s156 = sphi 0, %s140
    $region4: #{forward.1} parent=1 // loop_header_branch
      %19 = sbr.rel (%p17) target = $region8
    $region5: #{forward.1} parent=1 // loop_body
      %s21 = ssub.s32 %s16, 1
      %s22 = ssub.s32 %s16, 2
      %s23 = sadd.s32 %s16, 1
      %s24 = ssub.s32 %s16, %s23
      %p25 = scmp.eq.s32.totalorder %s24, 0
      %s27 = sadd.s32 %s26, 1
      %s28 = scalar_select %p25, %s26, %s27
      %p31 = pneg %p25
      %p32 = scmp.eq.s32.totalorder %s16, 1
      %p33 = por %p31, %p32
      %p34 = scmp.ne.s32.totalorder %s26, %s29
      %p35 = scmp.eq.s32.totalorder %s16, 0
      %p36 = por %p34, %p35
      %p37 = scmp.ne.s32.totalorder %s26, %s29
      %p38 = scmp.eq.s32.totalorder %s21, 1
      %p39 = por %p37, %p38
      %p40 = scmp.ne.s32.totalorder %s29, %s30
      %p41 = scmp.eq.s32.totalorder %s21, 0
      %p42 = por %p40, %p41
      %p43 = scmp.ne.s32.totalorder %s29, %s30
      %p44 = scmp.eq.s32.totalorder %s22, 1
      %p45 = por %p43, %p44
      %p47 = scmp.ne.s32.totalorder %s30, %s46
      %p48 = scmp.eq.s32.totalorder %s22, 0
      %p49 = por %p47, %p48
      %s51 = sadd.s32 %s50, 1
      %p54 = scmp.eq.s32.totalorder %s16, 1
      %p55 = scmp.ne.s32.totalorder %s50, %s52
      %p56 = scmp.eq.s32.totalorder %s16, 0
      %p57 = por %p55, %p56
      %p58 = scmp.ne.s32.totalorder %s50, %s52
      %p59 = scmp.eq.s32.totalorder %s21, 1
      %p60 = por %p58, %p59
      %p61 = scmp.ne.s32.totalorder %s52, %s53
      %p62 = scmp.eq.s32.totalorder %s21, 0
      %p63 = por %p61, %p62
      %p64 = scmp.ne.s32.totalorder %s52, %s53
      %p65 = scmp.eq.s32.totalorder %s22, 1
      %p66 = por %p64, %p65
      %p68 = scmp.ne.s32.totalorder %s53, %s67
      %p69 = scmp.eq.s32.totalorder %s22, 0
      %p70 = por %p68, %p69
      %s72 = sadd.s32 %s71, 1
      %p75 = scmp.eq.s32.totalorder %s16, 1
      %p76 = scmp.ne.s32.totalorder %s71, %s73
      %p77 = scmp.eq.s32.totalorder %s16, 0
      %p78 = por %p76, %p77
      %p79 = scmp.ne.s32.totalorder %s71, %s73
      %p80 = scmp.eq.s32.totalorder %s21, 1
      %p81 = por %p79, %p80
      %p82 = scmp.ne.s32.totalorder %s73, %s74
      %p83 = scmp.eq.s32.totalorder %s21, 0
      %p84 = por %p82, %p83
      %p85 = scmp.ne.s32.totalorder %s73, %s74
      %p86 = scmp.eq.s32.totalorder %s22, 1
      %p87 = por %p85, %p86
      %p89 = scmp.ne.s32.totalorder %s74, %s88
      %p90 = scmp.eq.s32.totalorder %s22, 0
      %p91 = por %p89, %p90
      %s93 = sadd.s32 %s92, 1
      %p96 = scmp.eq.s32.totalorder %s16, 1
      %p97 = scmp.ne.s32.totalorder %s92, %s94
      %p98 = scmp.eq.s32.totalorder %s16, 0
      %p99 = por %p97, %p98
      %p100 = scmp.ne.s32.totalorder %s92, %s94
      %p101 = scmp.eq.s32.totalorder %s21, 1
      %p102 = por %p100, %p101
      %p103 = scmp.ne.s32.totalorder %s94, %s95
      %p104 = scmp.eq.s32.totalorder %s21, 0
      %p105 = por %p103, %p104
      %p106 = scmp.ne.s32.totalorder %s94, %s95
      %p107 = scmp.eq.s32.totalorder %s22, 1
      %p108 = por %p106, %p107
      %p110 = scmp.ne.s32.totalorder %s95, %s109
      %p111 = scmp.eq.s32.totalorder %s22, 0
      %p112 = por %p110, %p111
      %s114 = sadd.s32 %s113, 1
      %p117 = scmp.eq.s32.totalorder %s16, 1
      %p118 = scmp.ne.s32.totalorder %s113, %s115
      %p119 = scmp.eq.s32.totalorder %s16, 0
      %p120 = por %p118, %p119
      %p121 = scmp.ne.s32.totalorder %s113, %s115
      %p122 = scmp.eq.s32.totalorder %s21, 1
      %p123 = por %p121, %p122
      %p124 = scmp.ne.s32.totalorder %s115, %s116
      %p125 = scmp.eq.s32.totalorder %s21, 0
      %p126 = por %p124, %p125
      %p127 = scmp.ne.s32.totalorder %s115, %s116
      %p128 = scmp.eq.s32.totalorder %s22, 1
      %p129 = por %p127, %p128
      %p131 = scmp.ne.s32.totalorder %s116, %s130
      %p132 = scmp.eq.s32.totalorder %s22, 0
      %p133 = por %p131, %p132
      %s134 = ssub.s32 %s16, %s23
      %p135 = scmp.eq.s32.totalorder %s134, 0
      %s137 = sadd.s32 %s136, 1
      %s138 = scalar_select %p135, %s136, %s137
      %p141 = pneg %p135
      %p142 = scmp.eq.s32.totalorder %s16, 1
      %p143 = por %p141, %p142
      %p144 = scmp.ne.s32.totalorder %s136, %s139
      %p145 = scmp.eq.s32.totalorder %s16, 0
      %p146 = por %p144, %p145
      %p147 = scmp.ne.s32.totalorder %s136, %s139
      %p148 = scmp.eq.s32.totalorder %s21, 1
      %p149 = por %p147, %p148
      %p150 = scmp.ne.s32.totalorder %s139, %s140
      %p151 = scmp.eq.s32.totalorder %s21, 0
      %p152 = por %p150, %p151
      %p153 = scmp.ne.s32.totalorder %s139, %s140
      %p154 = scmp.eq.s32.totalorder %s22, 1
      %p155 = por %p153, %p154
      %p157 = scmp.ne.s32.totalorder %s140, %s156
      %p158 = scmp.eq.s32.totalorder %s22, 0
      %p159 = por %p157, %p158
      %p160 = scmp.le.s32.totalorder 1, %s16
      %p161 = scmp.lt.s32.totalorder %s16, 3
      %p162 = pnand %p160, %p161
      %p163 = pneg %p162
      // Predicated region
      $region9: #{forward.1} parent=5 // pred_check
        _
      $region10: #{forward.1} parent=5 // pred_check_branch
        %165 = sbr.rel (%p162) target = $region12
      $region11: #{forward.1} parent=5 // pred_region
        %s166 = ssub.s32 %s16, 1
        // Predicated region
        $region13: #{forward.1} parent=11 // pred_check
          %p167 = pneg %p63
        $region14: #{forward.1} parent=11 // pred_check_branch
          %169 = sbr.rel (%p167) target = $region16
        $region15: #{forward.1} parent=11 // pred_region
          %s171 = ssub.s32 1024, 1024
          %172 = vsyncadd [#allocation3], %s171
          %s173 = sshll.u32 [#allocation2], 4
          %s174 = int_to_ptr.vmem [resolvable:$true] %s173
          %179 = dma.hbm_to_vmem [thread:$0]  %s1, 1024, %s174, [#allocation3], 64, 64, 4
        $region16: #{forward.1} parent=11 // pred_fallthru
          _
        // Predicated region
        $region17: #{forward.1} parent=11 // pred_check
          %p180 = pneg %p84
        $region18: #{forward.1} parent=11 // pred_check_branch
          %182 = sbr.rel (%p180) target = $region20
        $region19: #{forward.1} parent=11 // pred_region
          _
        $region20: #{forward.1} parent=11 // pred_fallthru
          _
        // Predicated region
        $region21: #{forward.1} parent=11 // pred_check
          %p183 = pneg %p105
        $region22: #{forward.1} parent=11 // pred_check_branch
          %185 = sbr.rel (%p183) target = $region24
        $region23: #{forward.1} parent=11 // pred_region
          %s187 = ssub.s32 1024, 1024
          %188 = vsyncadd [#allocation6], %s187
          %s189 = sshll.u32 [#allocation5], 4
          %s190 = int_to_ptr.vmem [resolvable:$true] %s189
          %195 = dma.hbm_to_vmem [thread:$0]  %s3, 1024, %s190, [#allocation6], 64, 64, 4
        $region24: #{forward.1} parent=11 // pred_fallthru
          _
        // Predicated region
        $region25: #{forward.1} parent=11 // pred_check
          %p196 = pneg %p126
        $region26: #{forward.1} parent=11 // pred_check_branch
          %198 = sbr.rel (%p196) target = $region28
        $region27: #{forward.1} parent=11 // pred_region
          _
        $region28: #{forward.1} parent=11 // pred_fallthru
          _
      $region12: #{forward.1} parent=5 // pred_fallthru
        _
      %p199 = scmp.lt.s32.totalorder %s16, 2
      // Predicated region
      $region29: #{forward.1} parent=5 // pred_check
        %p200 = pneg %p199
      $region30: #{forward.1} parent=5 // pred_check_branch
        %202 = sbr.rel (%p200) target = $region32
      $region31: #{forward.1} parent=5 // pred_region
        // Predicated region
        $region33: #{forward.1} parent=31 // pred_check
          %p203 = pneg %p36
        $region34: #{forward.1} parent=31 // pred_check_branch
          %205 = sbr.rel (%p203) target = $region36
        $region35: #{forward.1} parent=31 // pred_region
          %p206 = scmp.lt.s32.totalorder %s16, 1
          %s207 = scalar_select %p206, %s16, 1
          %s208 = smul.addr %s207, 4
          %s209 = scalar_lea.vmem %s0, %s208
        $region36: #{forward.1} parent=31 // pred_fallthru
          _
      $region32: #{forward.1} parent=5 // pred_fallthru
        _
      %p210 = scmp.le.s32.totalorder 1, %s16
      %p211 = scmp.lt.s32.totalorder %s16, 3
      %p212 = pnand %p210, %p211
      %p213 = pneg %p212
      // Predicated region
      $region37: #{forward.1} parent=5 // pred_check
        _
      $region38: #{forward.1} parent=5 // pred_check_branch
        %215 = sbr.rel (%p212) target = $region40
      $region39: #{forward.1} parent=5 // pred_region
        %s216 = ssub.s32 %s16, 1
        // Predicated region
        $region41: #{forward.1} parent=39 // pred_check
          %p217 = pneg %p63
        $region42: #{forward.1} parent=39 // pred_check_branch
          %219 = sbr.rel (%p217) target = $region44
        $region43: #{forward.1} parent=39 // pred_region
          %220 = dma.done [#allocation3], 1024
        $region44: #{forward.1} parent=39 // pred_fallthru
          _
        // Predicated region
        $region45: #{forward.1} parent=39 // pred_check
          %p221 = pneg %p105
        $region46: #{forward.1} parent=39 // pred_check_branch
          %223 = sbr.rel (%p221) target = $region48
        $region47: #{forward.1} parent=39 // pred_region
          %224 = dma.done [#allocation6], 1024
        $region48: #{forward.1} parent=39 // pred_fallthru
          _
        %p225 = scmp.lt.s32.totalorder %s21, 1
        %s226 = scalar_select %p225, %s21, 1
        %s227 = smul.addr %s226, 4
        %s228 = scalar_lea.vmem %s0, %s227
        %p229 = pneg %p42
        %p230 = pneg %p39
        %p231 = pneg %p63
        %p232 = pneg %p60
        %p233 = pneg %p84
        %p234 = pneg %p81
        %p235 = pneg %p105
        %p236 = pneg %p102
        %p237 = pneg %p126
        %p238 = pneg %p123
        %p239 = pneg %p152
        %p240 = pneg %p149
        %s241 = sand.u32 %s139, 1
        %s242 = scalar_lea.sflag [#allocation4], %s241
        %s243 = sand.u32 %s139, 1
        %s244 = smul.addr %s243, 8
        %s245 = scalar_lea.vmem [#allocation7], %s244
        %p246 = scmp.lt.s32.totalorder %s21, 1
        %s247 = scalar_select %p246, %s21, 1
        %s248 = smul.addr %s247, 4
        %s249 = scalar_lea.vmem %s0, %s248
        %v251 = vld [vmem:[%s249] sm:$0xf]
        %v252 = vld [vmem:[#allocation2] sm:$0xf]
        %v253 = vld [vmem:[#allocation2 + $0x4] sm:$0xf]
        %v254 = vld [vmem:[#allocation2 + $0x8] sm:$0xf]
        %v255 = vld [vmem:[#allocation2 + $0xc] sm:$0xf]
        %v256 = vld [vmem:[#allocation2 + $0x10] sm:$0xf]
        %v257 = vld [vmem:[#allocation2 + $0x14] sm:$0xf]
        %v258 = vld [vmem:[#allocation2 + $0x18] sm:$0xf]
        %v259 = vld [vmem:[#allocation2 + $0x1c] sm:$0xf]
        %v260 = vld [vmem:[#allocation2 + $0x20] sm:$0xf]
        %v261 = vld [vmem:[#allocation2 + $0x24] sm:$0xf]
        %v262 = vld [vmem:[#allocation2 + $0x28] sm:$0xf]
        %v263 = vld [vmem:[#allocation2 + $0x2c] sm:$0xf]
        %v264 = vld [vmem:[#allocation2 + $0x30] sm:$0xf]
        %v265 = vld [vmem:[#allocation2 + $0x34] sm:$0xf]
        %v266 = vld [vmem:[#allocation2 + $0x38] sm:$0xf]
        %v267 = vld [vmem:[#allocation2 + $0x3c] sm:$0xf]
        %v268 = vld [vmem:[%s2] sm:$0x1]
        %v270 = vlaneseq
        %v271 = vshrl.u32 %v270, 7
        %v272 = vsub.s32 0, %v271
        %v273 = vrot.slane %v268, %v272
        %v291 = vunpack.c.l.b16 %v252
        %v292 = vunpack.c.l.b16 %v253
        %v293 = vunpack.c.l.b16 %v254
        %v294 = vunpack.c.l.b16 %v255
        %v295 = vunpack.c.l.b16 %v256
        %v296 = vunpack.c.l.b16 %v257
        %v297 = vunpack.c.l.b16 %v258
        %v298 = vunpack.c.l.b16 %v259
        %v299 = vunpack.c.l.b16 %v260
        %v300 = vunpack.c.l.b16 %v261
        %v301 = vunpack.c.l.b16 %v262
        %v302 = vunpack.c.l.b16 %v263
        %v303 = vunpack.c.l.b16 %v264
        %v304 = vunpack.c.l.b16 %v265
        %v305 = vunpack.c.l.b16 %v266
        %v306 = vunpack.c.l.b16 %v267
        %v307 = vpack.c.b16 %v292, %v291
        %v308 = vpack.c.b16 %v294, %v293
        %v309 = vpack.c.b16 %v296, %v295
        %v310 = vpack.c.b16 %v298, %v297
        %v311 = vpack.c.b16 %v300, %v299
        %v312 = vpack.c.b16 %v302, %v301
        %v313 = vpack.c.b16 %v304, %v303
        %v314 = vpack.c.b16 %v306, %v305
        %323 = vmatprep.subr.bf16.mxu0 0
        %324 = vmatpush1.bf16.msra.mxu0 %v314
        %325 = vmatprep.subr.bf16.mxu0 0
        %326 = vmatpush1.bf16.msra.mxu0 %v313
        %327 = vmatprep.subr.bf16.mxu0 0
        %328 = vmatpush1.bf16.msra.mxu0 %v312
        %329 = vmatprep.subr.bf16.mxu0 0
        %330 = vmatpush1.bf16.msra.mxu0 %v311
        %331 = vmatprep.subr.bf16.mxu0 0
        %332 = vmatpush1.bf16.msra.mxu0 %v310
        %333 = vmatprep.subr.bf16.mxu0 0
        %334 = vmatpush1.bf16.msra.mxu0 %v309
        %335 = vmatprep.subr.bf16.mxu0 0
        %336 = vmatpush1.bf16.msra.mxu0 %v308
        %337 = vmatprep.subr.bf16.mxu0 0
        %338 = vmatpush1.bf16.msra.mxu0 %v307
        %339 = vmatprep.subr.bf16.mxu0 0
        %340 = vmatpush2.bf16.msra.mxu0 0
        %341 = vmatprep.subr.bf16.mxu0 0
        %342 = vmatpush2.bf16.msra.mxu0 0
        %343 = vmatprep.subr.bf16.mxu0 0
        %344 = vmatpush2.bf16.msra.mxu0 0
        %345 = vmatprep.subr.bf16.mxu0 0
        %346 = vmatpush2.bf16.msra.mxu0 0
        %347 = vmatprep.subr.bf16.mxu0 0
        %348 = vmatpush2.bf16.msra.mxu0 0
        %349 = vmatprep.subr.bf16.mxu0 0
        %350 = vmatpush2.bf16.msra.mxu0 0
        %351 = vmatprep.subr.bf16.mxu0 0
        %352 = vmatpush2.bf16.msra.mxu0 0
        %353 = vmatprep.subr.bf16.mxu0 0
        %354 = vmatpush2.bf16.msra.mxu0 0
        %355 = vmatprep.mubr.bf16.mxu0 0
        %356 = vmatmul.mubr.bf16.gmra.mxu0 %v251
        %v357 = vpop.f32.mrf.mxu0
        %v358 = vadd.f32 %v273, %v357
        %v359 = vpop.f32.mrf.mxu0
        %v360 = vpop.f32.mrf.mxu0
        %v361 = vpop.f32.mrf.mxu0
        %362 = vdwg.mxu0
        %v363 = vmax.f32 %v358, 0.0
        %v364 = vpack.c.bf16 %v363, %v363
        %v365 = vld [vmem:[#allocation5] sm:$0xf]
        %v366 = vld [vmem:[#allocation5 + $0x4] sm:$0xf]
        %v367 = vld [vmem:[#allocation5 + $0x8] sm:$0xf]
        %v368 = vld [vmem:[#allocation5 + $0xc] sm:$0xf]
        %v369 = vld [vmem:[#allocation5 + $0x10] sm:$0xf]
        %v370 = vld [vmem:[#allocation5 + $0x14] sm:$0xf]
        %v371 = vld [vmem:[#allocation5 + $0x18] sm:$0xf]
        %v372 = vld [vmem:[#allocation5 + $0x1c] sm:$0xf]
        %v373 = vld [vmem:[#allocation5 + $0x20] sm:$0xf]
        %v374 = vld [vmem:[#allocation5 + $0x24] sm:$0xf]
        %v375 = vld [vmem:[#allocation5 + $0x28] sm:$0xf]
        %v376 = vld [vmem:[#allocation5 + $0x2c] sm:$0xf]
        %v377 = vld [vmem:[#allocation5 + $0x30] sm:$0xf]
        %v378 = vld [vmem:[#allocation5 + $0x34] sm:$0xf]
        %v379 = vld [vmem:[#allocation5 + $0x38] sm:$0xf]
        %v380 = vld [vmem:[#allocation5 + $0x3c] sm:$0xf]
        %v381 = vld [vmem:[%s4] sm:$0x1]
        %v383 = vlaneseq
        %v384 = vshrl.u32 %v383, 7
        %v385 = vsub.s32 0, %v384
        %v386 = vrot.slane %v381, %v385
        %v404 = vunpack.c.l.b16 %v365
        %v405 = vunpack.c.l.b16 %v366
        %v406 = vunpack.c.l.b16 %v367
        %v407 = vunpack.c.l.b16 %v368
        %v408 = vunpack.c.l.b16 %v369
        %v409 = vunpack.c.l.b16 %v370
        %v410 = vunpack.c.l.b16 %v371
        %v411 = vunpack.c.l.b16 %v372
        %v412 = vunpack.c.l.b16 %v373
        %v413 = vunpack.c.l.b16 %v374
        %v414 = vunpack.c.l.b16 %v375
        %v415 = vunpack.c.l.b16 %v376
        %v416 = vunpack.c.l.b16 %v377
        %v417 = vunpack.c.l.b16 %v378
        %v418 = vunpack.c.l.b16 %v379
        %v419 = vunpack.c.l.b16 %v380
        %v420 = vpack.c.b16 %v405, %v404
        %v421 = vpack.c.b16 %v407, %v406
        %v422 = vpack.c.b16 %v409, %v408
        %v423 = vpack.c.b16 %v411, %v410
        %v424 = vpack.c.b16 %v413, %v412
        %v425 = vpack.c.b16 %v415, %v414
        %v426 = vpack.c.b16 %v417, %v416
        %v427 = vpack.c.b16 %v419, %v418
        %436 = vmatprep.subr.bf16.mxu0 0
        %437 = vmatpush1.bf16.msra.mxu0 %v427
        %438 = vmatprep.subr.bf16.mxu0 0
        %439 = vmatpush1.bf16.msra.mxu0 %v426
        %440 = vmatprep.subr.bf16.mxu0 0
        %441 = vmatpush1.bf16.msra.mxu0 %v425
        %442 = vmatprep.subr.bf16.mxu0 0
        %443 = vmatpush1.bf16.msra.mxu0 %v424
        %444 = vmatprep.subr.bf16.mxu0 0
        %445 = vmatpush1.bf16.msra.mxu0 %v423
        %446 = vmatprep.subr.bf16.mxu0 0
        %447 = vmatpush1.bf16.msra.mxu0 %v422
        %448 = vmatprep.subr.bf16.mxu0 0
        %449 = vmatpush1.bf16.msra.mxu0 %v421
        %450 = vmatprep.subr.bf16.mxu0 0
        %451 = vmatpush1.bf16.msra.mxu0 %v420
        %452 = vmatprep.subr.bf16.mxu0 0
        %453 = vmatpush2.bf16.msra.mxu0 0
        %454 = vmatprep.subr.bf16.mxu0 0
        %455 = vmatpush2.bf16.msra.mxu0 0
        %456 = vmatprep.subr.bf16.mxu0 0
        %457 = vmatpush2.bf16.msra.mxu0 0
        %458 = vmatprep.subr.bf16.mxu0 0
        %459 = vmatpush2.bf16.msra.mxu0 0
        %460 = vmatprep.subr.bf16.mxu0 0
        %461 = vmatpush2.bf16.msra.mxu0 0
        %462 = vmatprep.subr.bf16.mxu0 0
        %463 = vmatpush2.bf16.msra.mxu0 0
        %464 = vmatprep.subr.bf16.mxu0 0
        %465 = vmatpush2.bf16.msra.mxu0 0
        %466 = vmatprep.subr.bf16.mxu0 0
        %467 = vmatpush2.bf16.msra.mxu0 0
        %468 = vmatprep.mubr.bf16.mxu0 0
        %469 = vmatmul.mubr.bf16.gmra.mxu0 %v364
        %v470 = vpop.f32.mrf.mxu0
        %v471 = vadd.f32 %v386, %v470
        %v472 = vpop.f32.mrf.mxu0
        %v473 = vpop.f32.mrf.mxu0
        %v474 = vpop.f32.mrf.mxu0
        %475 = vdwg.mxu0
        %476 = vst [vmem:[%s245] sm:$0xff] %v471
        %s477 = sand.u32 %s139, 1
        %s478 = scalar_lea.sflag [#allocation4], %s477
        %s479 = sand.u32 %s139, 1
        %s480 = smul.addr %s479, 8
        %s481 = scalar_lea.vmem [#allocation7], %s480
        // Predicated region
        $region49: #{forward.1} parent=39 // pred_check
          %p482 = pneg %p149
        $region50: #{forward.1} parent=39 // pred_check_branch
          %484 = sbr.rel (%p482) target = $region52
        $region51: #{forward.1} parent=39 // pred_region
          %s486 = ssub.s32 128, 128
          %487 = vsyncadd %s478, %s486
          %s488 = smul.addr %s21, 128
          %s489 = scalar_lea.hbm %s5, %s488
          %s491 = sshll.u32 %s481, 4
          %s492 = int_to_ptr.vmem [resolvable:$true] %s491
          %494 = dma.vmem_to_hbm [thread:$0]  %s492, 128, %s489, %s478
        $region52: #{forward.1} parent=39 // pred_fallthru
          _
      $region40: #{forward.1} parent=5 // pred_fallthru
        _
      %p495 = scmp.le.s32.totalorder 2, %s16
      // Predicated region
      $region53: #{forward.1} parent=5 // pred_check
        %p496 = pneg %p495
      $region54: #{forward.1} parent=5 // pred_check_branch
        %498 = sbr.rel (%p496) target = $region56
      $region55: #{forward.1} parent=5 // pred_region
        %s499 = ssub.s32 %s16, 2
        // Predicated region
        $region57: #{forward.1} parent=55 // pred_check
          %p500 = pneg %p155
        $region58: #{forward.1} parent=55 // pred_check_branch
          %502 = sbr.rel (%p500) target = $region60
        $region59: #{forward.1} parent=55 // pred_region
          %s503 = sand.u32 %s140, 1
          %s504 = scalar_lea.sflag [#allocation4], %s503
          %s505 = sand.u32 %s140, 1
          %s506 = smul.addr %s505, 8
          %s507 = scalar_lea.vmem [#allocation7], %s506
          %508 = dma.done %s504, 128
        $region60: #{forward.1} parent=55 // pred_fallthru
          _
      $region56: #{forward.1} parent=5 // pred_fallthru
        _
    $region6: #{forward.1} parent=1 // loop_footer
      %s20 = sadd.s32 1, %s16
    $region7: #{forward.1} parent=1 // loop_footer_branch
      %15 = sbr.rel target = $region3
    $region8: #{forward.1} parent=1 // loop_exit
      _
    %509 = vsyncpa [#allocation3], 1
    %s510 = scalar_lea.sflag [#allocation3], 1
    %511 = vsyncpa %s510, 1
    %512 = vsyncpa [#allocation6], 1
    %513 = vsyncpa [#allocation4], 1
    %s514 = scalar_lea.sflag [#allocation4], 1
    %515 = vsyncpa %s514, 1

</llo_original>
